<compile_context>
chip_gen: v6e
topology: v6e:2x2x1
jax: 0.10.0
libtpu: 0.0.40
codegen_flags: <defaults>
</compile_context>

<pallas_src>
import functools

import numpy as np
import jax
import jax.numpy as jnp
from jax import lax
from jax.experimental import pallas as pl
from jax.experimental.pallas import tpu as pltpu


# ----------------------------- small helpers -----------------------------------

def _round_up(x, m):
    return (x + m - 1) // m * m


_GELU_C = 0.7978845608028654  # sqrt(2/pi)


def _gelu(x):
    # tanh-approximate GELU (TPU-friendly: tanh runs on the EUP).
    # TODO(synk): PyTorch nn.GELU() uses exact erf; max abs difference is ~3e-4.
    return 0.5 * x * (1.0 + jnp.tanh(_GELU_C * (x + 0.044715 * x * x * x)))


def layer_norm(x, gamma, beta, eps=1e-5):
    mu = jnp.mean(x, axis=-1, keepdims=True)
    var = jnp.mean(jnp.square(x - mu), axis=-1, keepdims=True)
    return (x - mu) * lax.rsqrt(var + eps) * gamma + beta


def create_mask_np(window_size, displacement, upper_lower, left_right):
    n = window_size ** 2
    mask = np.zeros((n, n), dtype=np.float32)
    if upper_lower:
        mask[-displacement * window_size:, :-displacement * window_size] = -np.inf
        mask[:-displacement * window_size, -displacement * window_size:] = -np.inf
    if left_right:
        mask = mask.reshape(window_size, window_size, window_size, window_size)
        mask[:, -displacement:, :, :-displacement] = -np.inf
        mask[:, :-displacement, :, -displacement:] = -np.inf
        mask = mask.reshape(n, n)
    return mask


def get_relative_distances_np(window_size):
    idx = np.array([[x, y] for x in range(window_size) for y in range(window_size)])
    return idx[None, :, :] - idx[:, None, :]


# ----------------------------- tiled linear (Pallas) ----------------------------

_TM_MAX, _TK_MAX, _TN_MAX = 256, 512, 512
# Explicit VMEM budget: worst-case double-buffered tiles are ~4 MiB, far below the
# 48 MiB cap, which itself fits v7x's 64 MiB physical VMEM (and v5e/v6e 128 MiB).
_VMEM_LIMIT = 48 * 1024 * 1024


def _linear_kernel(x_ref, w_ref, b_ref, o_ref, acc_ref, *, activation):
    @pl.when(pl.program_id(2) == 0)
    def _init():
        acc_ref[...] = jnp.zeros_like(acc_ref)

    acc_ref[...] += jnp.dot(x_ref[...], w_ref[...],
                            preferred_element_type=jnp.float32)

    @pl.when(pl.program_id(2) == pl.num_programs(2) - 1)
    def _finalize():
        acc = acc_ref[...] + b_ref[...]
        if activation == "gelu":
            acc = _gelu(acc)
        o_ref[...] = acc.astype(o_ref.dtype)


def pallas_linear(x, w, b=None, activation=None):
    """act(x @ w + b) with x:(M,K), w:(K,N) f32; bf16 MXU inputs, f32 accumulation."""
    M, K = x.shape
    _, N = w.shape

    tm = _TM_MAX if M > _TM_MAX else _round_up(M, 8)
    tk = _TK_MAX if K > _TK_MAX else K          # full-K block is always legal
    tn = _TN_MAX if N > _TN_MAX else N          # full-N block is always legal
    Mp, Kp, Np = _round_up(M, tm), _round_up(K, tk), _round_up(N, tn)

    xb = x.astype(jnp.bfloat16)
    wb = w.astype(jnp.bfloat16)
    if (Mp, Kp) != (M, K):
        xb = jnp.pad(xb, ((0, Mp - M), (0, Kp - K)))
    if (Kp, Np) != (K, N):
        wb = jnp.pad(wb, ((0, Kp - K), (0, Np - N)))
    bf = jnp.zeros((N,), jnp.float32) if b is None else b.astype(jnp.float32)
    if Np != N:
        bf = jnp.pad(bf, (0, Np - N))
    bf = bf.reshape(1, Np)

    out = pl.pallas_call(
        functools.partial(_linear_kernel, activation=activation),
        out_shape=jax.ShapeDtypeStruct((Mp, Np), jnp.float32),
        grid_spec=pltpu.PrefetchScalarGridSpec(
            num_scalar_prefetch=0,
            grid=(Mp // tm, Np // tn, Kp // tk),
            in_specs=[
                pl.BlockSpec((tm, tk), lambda i, j, k: (i, k)),
                pl.BlockSpec((tk, tn), lambda i, j, k: (k, j)),
                pl.BlockSpec((1, tn), lambda i, j, k: (0, j)),
            ],
            out_specs=pl.BlockSpec((tm, tn), lambda i, j, k: (i, j)),
            scratch_shapes=[pltpu.VMEM((tm, tn), jnp.float32)],
        ),
        compiler_params=pltpu.CompilerParams(
            dimension_semantics=("parallel", "parallel", "arbitrary"),
            vmem_limit_bytes=_VMEM_LIMIT),
    )(xb, wb, bf)

    if (Mp, Np) != (M, N):
        out = out[:M, :N]
    return out


# ----------------------------- window attention (Pallas) ------------------------

def _window_attn_kernel(*refs, scale, g_tile, num_windows, nw_w, shifted):
    if shifted:
        q_ref, k_ref, v_ref, bias_ref, ul_ref, lr_ref, o_ref = refs
    else:
        q_ref, k_ref, v_ref, bias_ref, o_ref = refs

    q = q_ref[...]          # (g_tile, N, D) bf16
    k = k_ref[...]
    v = v_ref[...]

    # QK^T: contract the D dims, batch over the window axis (no explicit transpose).
    dots = lax.dot_general(q, k, (((2,), (2,)), ((0,), (0,))),
                           preferred_element_type=jnp.float32)   # (g_tile, N, N) f32
    dots = dots * scale + bias_ref[...]                          # shared (N,N) bias

    if shifted:
        # Shift masks applied in-kernel: window-in-image index derived from the grid
        # position, so no (W,N,N) bias tensor is ever materialized in HBM.
        g0 = pl.program_id(0) * g_tile
        gid = g0 + lax.broadcasted_iota(jnp.int32, (g_tile, 1, 1), 0)
        w_idx = gid % num_windows
        dots = dots + jnp.where(w_idx >= num_windows - nw_w,
                                ul_ref[...][None, :, :], 0.0)
        dots = dots + jnp.where(w_idx % nw_w == nw_w - 1,
                                lr_ref[...][None, :, :], 0.0)

    m = jnp.max(dots, axis=-1, keepdims=True)
    e = jnp.exp(dots - m)
    s = jnp.sum(e, axis=-1, keepdims=True)
    attn = e * pl.reciprocal(s, approx=True)                     # EUP reciprocal

    out = lax.dot_general(attn.astype(jnp.bfloat16), v,
                          (((2,), (1,)), ((0,), (0,))),
                          preferred_element_type=jnp.float32)    # (g_tile, N, D)
    o_ref[...] = out.astype(o_ref.dtype)


def _pick_g_tile(g):
    if g >= 64:
        return 32
    # Prefer >=2 blocks (so v7x's two TensorCores both get work); rows multiple of 8.
    return max(8, _round_up(g, 16) // 2)


def pallas_window_attention(q, k, v, bias, ul_mask, lr_mask, *,
                            scale, num_windows, nw_w, shifted):
    """q, k, v: (G, N, D) f32 with G = batch*heads*num_windows; returns (G, N, D) f32."""
    G, N, D = q.shape
    g_tile = _pick_g_tile(G)
    Gp = _round_up(G, g_tile)

    qb, kb, vb = (t.astype(jnp.bfloat16) for t in (q, k, v))
    if Gp != G:
        pad = ((0, Gp - G), (0, 0), (0, 0))
        qb, kb, vb = (jnp.pad(t, pad) for t in (qb, kb, vb))

    qkv_spec = pl.BlockSpec((g_tile, N, D), lambda g: (g, 0, 0))
    nn_spec = pl.BlockSpec((N, N), lambda g: (0, 0))
    inputs = [qb, kb, vb, bias.astype(jnp.float32)]
    in_specs = [qkv_spec, qkv_spec, qkv_spec, nn_spec]
    if shifted:
        inputs += [ul_mask.astype(jnp.float32), lr_mask.astype(jnp.float32)]
        in_specs += [nn_spec, nn_spec]

    # Note: output keeps full (N, D) minor dims -> each block is one contiguous HBM slab
    # of g_tile*N*D elements; an in-kernel (N,D)->(N*D) relayout was skipped for
    # lowering robustness.
    out = pl.pallas_call(
        functools.partial(_window_attn_kernel, scale=scale, g_tile=g_tile,
                          num_windows=num_windows, nw_w=nw_w, shifted=shifted),
        out_shape=jax.ShapeDtypeStruct((Gp, N, D), jnp.float32),
        grid_spec=pltpu.PrefetchScalarGridSpec(
            num_scalar_prefetch=0,
            grid=(Gp // g_tile,),
            in_specs=in_specs,
            out_specs=pl.BlockSpec((g_tile, N, D), lambda g: (g, 0, 0)),
        ),
        compiler_params=pltpu.CompilerParams(
            dimension_semantics=("parallel",),
            vmem_limit_bytes=_VMEM_LIMIT),
    )(*inputs)
    return out[:G] if Gp != G else out


# ----------------------------- module forward (Pallas path) ---------------------

def window_attention_forward(x, p, *, heads, head_dim, window_size, shifted,
                             relative_pos_embedding):
    b, n_h, n_w, dim = x.shape
    ws = window_size
    inner = heads * head_dim
    scale = head_dim ** (-0.5)
    disp = ws // 2

    if shifted:
        x = jnp.roll(x, shift=(-disp, -disp), axis=(1, 2))

    qkv = pallas_linear(x.reshape(-1, dim), p["w_qkv"]).reshape(b, n_h, n_w, 3 * inner)
    q, k, v = jnp.split(qkv, 3, axis=-1)

    nw_h, nw_w = n_h // ws, n_w // ws
    num_windows = nw_h * nw_w
    N = ws * ws

    def to_windows(t):                      # (b, n_h, n_w, inner) -> (G, N, D)
        t = t.reshape(b, nw_h, ws, nw_w, ws, heads, head_dim)
        t = t.transpose(0, 5, 1, 3, 2, 4, 6)
        return t.reshape(b * heads * num_windows, N, head_dim)

    q, k, v = to_windows(q), to_windows(k), to_windows(v)

    if relative_pos_embedding:
        ri = p["relative_indices"]
        bias = p["pos_embedding"][ri[:, :, 0], ri[:, :, 1]]
    else:
        bias = p["pos_embedding"]

    out = pallas_window_attention(
        q, k, v, bias, p.get("upper_lower_mask"), p.get("left_right_mask"),
        scale=scale, num_windows=num_windows, nw_w=nw_w, shifted=shifted)

    out = out.reshape(b, heads, nw_h, nw_w, ws, ws, head_dim)
    out = out.transpose(0, 2, 4, 3, 5, 1, 6).reshape(b, n_h, n_w, inner)
    out = pallas_linear(out.reshape(-1, inner), p["w_out"], p["b_out"])
    out = out.reshape(b, n_h, n_w, dim)

    if shifted:
        out = jnp.roll(out, shift=(disp, disp), axis=(1, 2))
    return out


def feed_forward_forward(x, p):
    b, n_h, n_w, dim = x.shape
    h = pallas_linear(x.reshape(-1, dim), p["w1"], p["b1"], activation="gelu")
    y = pallas_linear(h, p["w2"], p["b2"])
    return y.reshape(b, n_h, n_w, dim)


def swin_block_forward(x, p, cfg, shifted):
    a = layer_norm(x, p["ln1_g"], p["ln1_b"])
    x = x + window_attention_forward(
        a, p["attn"], heads=cfg["num_heads"], head_dim=cfg["head_dim"],
        window_size=cfg["window_size"], shifted=shifted,
        relative_pos_embedding=cfg["relative_pos_embedding"])
    f = layer_norm(x, p["ln2_g"], p["ln2_b"])
    x = x + feed_forward_forward(f, p["ffn"])
    return x


def patch_merging_forward(x, p, downscaling_factor):
    # nn.Unfold(kernel=stride=df) + view + permute + Linear; channels-last output.
    b, c, h_img, w_img = x.shape
    df = downscaling_factor
    nh, nw = h_img // df, w_img // df
    t = x.reshape(b, c, nh, df, nw, df).transpose(0, 2, 4, 1, 3, 5)
    t = t.reshape(b, nh, nw, c * df * df)
    y = pallas_linear(t.reshape(-1, c * df * df), p["w"], p["b"])
    return y.reshape(b, nh, nw, p["w"].shape[1])


def stage_module_forward(x, params, cfg):
    x = patch_merging_forward(x, params["patch"], cfg["downscaling_factor"])
    # StageModule.forward in the PyTorch reference applies only the *regular*
    # (non-shifted) block of each pair.
    for blk in params["blocks"]:
        x = swin_block_forward(x, blk, cfg, shifted=False)
    return x.transpose(0, 3, 1, 2)


# ----------------------------- parameter init -----------------------------------

def _normal(key, shape, scale=1.0):
    return scale * jax.random.normal(key, shape, jnp.float32)


def init_attention_params(key, dim, heads, head_dim, window_size, shifted,
                          relative_pos_embedding):
    inner = heads * head_dim
    ws = window_size
    k1, k2, k3, k4 = jax.random.split(key, 4)
    p = {
        "w_qkv": _normal(k1, (dim, 3 * inner), dim ** -0.5),
        "w_out": _normal(k2, (inner, dim), inner ** -0.5),
        "b_out": _normal(k3, (dim,), 0.02),
    }
    if relative_pos_embedding:
        rel = get_relative_distances_np(ws) + ws - 1
        p["relative_indices"] = jnp.asarray(rel, dtype=jnp.int32)
        p["pos_embedding"] = _normal(k4, (2 * ws - 1, 2 * ws - 1))
    else:
        p["pos_embedding"] = _normal(k4, (ws * ws, ws * ws))
    if shifted:
        disp = ws // 2
        p["upper_lower_mask"] = jnp.asarray(create_mask_np(ws, disp, True, False))
        p["left_right_mask"] = jnp.asarray(create_mask_np(ws, disp, False, True))
    return p


def init_block_params(key, dim, heads, head_dim, window_size, relative_pos_embedding):
    k1, k2, k3, k4, k5, k6, k7, k8 = jax.random.split(key, 8)
    mlp = 4 * dim
    return {
        "ln1_g": 1.0 + _normal(k1, (dim,), 0.02),
        "ln1_b": _normal(k2, (dim,), 0.02),
        "attn": init_attention_params(k3, dim, heads, head_dim, window_size,
                                      False, relative_pos_embedding),
        "ln2_g": 1.0 + _normal(k4, (dim,), 0.02),
        "ln2_b": _normal(k5, (dim,), 0.02),
        "ffn": {
            "w1": _normal(k6, (dim, mlp), dim ** -0.5),
            "b1": _normal(k7, (mlp,), 0.02),
            "w2": _normal(k8, (mlp, dim), mlp ** -0.5),
            "b2": jnp.zeros((dim,), jnp.float32),
        },
    }


def init_stage_params(key, cfg):
    df = cfg["downscaling_factor"]
    patch_in = cfg["in_channels"] * df * df
    keys = jax.random.split(key, 2 + cfg["layers"] // 2)
    return {
        "patch": {
            "w": _normal(keys[0], (patch_in, cfg["hidden_dimension"]), patch_in ** -0.5),
            "b": _normal(keys[1], (cfg["hidden_dimension"],), 0.02),
        },
        "blocks": [init_block_params(keys[2 + i], cfg["hidden_dimension"],
                                     cfg["num_heads"], cfg["head_dim"],
                                     cfg["window_size"],
                                     cfg["relative_pos_embedding"])
                   for i in range(cfg["layers"] // 2)],
    }


# ----------------------------- pure-JAX references -------------------------------

def _ref_matmul(a, b, mode):
    if mode == "bf16":   # same quantization as the kernels: bf16 inputs, f32 accumulate
        return jnp.matmul(a.astype(jnp.bfloat16), b.astype(jnp.bfloat16),
                          preferred_element_type=jnp.float32)
    return jnp.matmul(a, b, precision=lax.Precision.HIGHEST)


def _ref_einsum(spec, a, b, mode):
    if mode == "bf16":
        return jnp.einsum(spec, a.astype(jnp.bfloat16), b.astype(jnp.bfloat16),
                          preferred_element_type=jnp.float32)
    return jnp.einsum(spec, a, b, precision=lax.Precision.HIGHEST)


def reference_window_attention(x, p, *, heads, head_dim, window_size, shifted,
                               relative_pos_embedding, mode):
    b, n_h, n_w, dim = x.shape
    ws = window_size
    inner = heads * head_dim
    scale = head_dim ** (-0.5)
    disp = ws // 2
    if shifted:
        x = jnp.roll(x, shift=(-disp, -disp), axis=(1, 2))
    qkv = _ref_matmul(x.reshape(-1, dim), p["w_qkv"], mode).reshape(b, n_h, n_w, 3 * inner)
    q, k, v = jnp.split(qkv, 3, axis=-1)
    nw_h, nw_w = n_h // ws, n_w // ws

    def to_windows(t):
        t = t.reshape(b, nw_h, ws, nw_w, ws, heads, head_dim)
        t = t.transpose(0, 5, 1, 3, 2, 4, 6)
        return t.reshape(b, heads, nw_h * nw_w, ws * ws, head_dim)

    q, k, v = to_windows(q), to_windows(k), to_windows(v)
    dots = _ref_einsum('bhwid,bhwjd->bhwij', q, k, mode) * scale
    if relative_pos_embedding:
        ri = p["relative_indices"]
        dots = dots + p["pos_embedding"][ri[:, :, 0], ri[:, :, 1]]
    else:
        dots = dots + p["pos_embedding"]
    if shifted:
        dots = dots.at[:, :, -nw_w:].add(p["upper_lower_mask"])
        dots = dots.at[:, :, nw_w - 1::nw_w].add(p["left_right_mask"])
    attn = jax.nn.softmax(dots, axis=-1)
    out = _ref_einsum('bhwij,bhwjd->bhwid', attn, v, mode)
    out = out.reshape(b, heads, nw_h, nw_w, ws, ws, head_dim)
    out = out.transpose(0, 2, 4, 3, 5, 1, 6).reshape(b, n_h, n_w, inner)
    out = (_ref_matmul(out.reshape(-1, inner), p["w_out"], mode)
           + p["b_out"]).reshape(b, n_h, n_w, dim)
    if shifted:
        out = jnp.roll(out, shift=(disp, disp), axis=(1, 2))
    return out


def reference_stage_module(x, params, cfg, mode):
    df = cfg["downscaling_factor"]
    dim = cfg["hidden_dimension"]
    b, c, h_img, w_img = x.shape
    nh, nw = h_img // df, w_img // df
    t = x.reshape(b, c, nh, df, nw, df).transpose(0, 2, 4, 1, 3, 5)
    t = t.reshape(b, nh, nw, c * df * df)
    t = (_ref_matmul(t.reshape(-1, c * df * df), params["patch"]["w"], mode)
         + params["patch"]["b"]).reshape(b, nh, nw, dim)
    for blk in params["blocks"]:
        a = layer_norm(t, blk["ln1_g"], blk["ln1_b"])
        t = t + reference_window_attention(
            a, blk["attn"], heads=cfg["num_heads"], head_dim=cfg["head_dim"],
            window_size=cfg["window_size"], shifted=False,
            relative_pos_embedding=cfg["relative_pos_embedding"], mode=mode)
        f = layer_norm(t, blk["ln2_g"], blk["ln2_b"])
        h1 = _gelu(_ref_matmul(f.reshape(-1, dim), blk["ffn"]["w1"], mode)
                   + blk["ffn"]["b1"])
        h2 = _ref_matmul(h1, blk["ffn"]["w2"], mode) + blk["ffn"]["b2"]
        t = t + h2.reshape(b, nh, nw, dim)
    return t.transpose(0, 3, 1, 2)


# ----------------------------- main ----------------------------------------------

if __name__ == "__main__":
    cfg = dict(in_channels=3, hidden_dimension=32, layers=2, downscaling_factor=4,
               num_heads=2, head_dim=16, window_size=4, relative_pos_embedding=True,
               dropout=0.0)  # eval mode: Dropout is identity

    B, H_IMG, W_IMG = 2, 32, 32
    key = jax.random.PRNGKey(0)
    kx, kp, kwa, kxa = jax.random.split(key, 4)
    x = jax.random.normal(kx, (B, cfg["in_channels"], H_IMG, W_IMG), jnp.float32)
    params = init_stage_params(kp, cfg)

    out = jax.block_until_ready(stage_module_forward(x, params, cfg))
    assert out.shape == (B, cfg["hidden_dimension"], H_IMG // 4, W_IMG // 4)

    # Structural check: reference with the same bf16-input / f32-accumulate quantization.
    ref_bf16 = jax.block_until_ready(reference_stage_module(x, params, cfg, mode="bf16"))
    np.testing.assert_allclose(np.asarray(out), np.asarray(ref_bf16),
                               rtol=1e-2, atol=1e-2)

    # Semantic check vs. full-f32 math (bf16 MXU inputs bound the difference).
    ref_f32 = jax.block_until_ready(reference_stage_module(x, params, cfg, mode="f32"))
    np.testing.assert_allclose(np.asarray(out), np.asarray(ref_f32),
                               rtol=5e-2, atol=5e-2)

    # Also exercise the shifted-window attention path (StageModule.forward itself only
    # runs the regular blocks, mirroring the PyTorch reference, but WindowAttention
    # supports shifted=True with in-kernel masks).
    dim = cfg["hidden_dimension"]
    attn_p = init_attention_params(kwa, dim, cfg["num_heads"], cfg["head_dim"],
                                   cfg["window_size"], True,
                                   cfg["relative_pos_embedding"])
    xa = jax.random.normal(kxa, (B, 8, 8, dim), jnp.float32)
    got = jax.block_until_ready(window_attention_forward(
        xa, attn_p, heads=cfg["num_heads"], head_dim=cfg["head_dim"],
        window_size=cfg["window_size"], shifted=True,
        relative_pos_embedding=cfg["relative_pos_embedding"]))
    want = jax.block_until_ready(reference_window_attention(
        xa, attn_p, heads=cfg["num_heads"], head_dim=cfg["head_dim"],
        window_size=cfg["window_size"], shifted=True,
        relative_pos_embedding=cfg["relative_pos_embedding"], mode="bf16"))
    np.testing.assert_allclose(np.asarray(got), np.asarray(want), rtol=1e-2, atol=1e-2)

    print("KERNEL_OK")
</pallas_src>

<mosaic_0001>
module attributes {stable_mosaic.version = 11 : i64} {
  func.func @_linear_kernel(%arg0: i32, %arg1: i32, %arg2: i32, %arg3: memref<128x48xbf16, #tpu.memory_space<vmem>>, %arg4: memref<48x32xbf16, #tpu.memory_space<vmem>>, %arg5: memref<1x32xf32, #tpu.memory_space<vmem>>, %arg6: memref<128x32xf32, #tpu.memory_space<vmem>>, %arg7: memref<128x32xf32, #tpu.memory_space<vmem>>) attributes {dimension_semantics = [#tpu.dimension_semantics<parallel>, #tpu.dimension_semantics<parallel>, #tpu.dimension_semantics<arbitrary>], iteration_bounds = array<i64: 1, 1, 1>, scalar_prefetch = 0 : i64, scratch_operands = 1 : i64, tpu.core_type = #tpu.core_type<tc>, window_params = [{transform_indices = @transform_0, window_bounds = array<i64: 128, 48>}, {transform_indices = @transform_1, window_bounds = array<i64: 48, 32>}, {transform_indices = @transform_2, window_bounds = array<i64: 1, 32>}, {transform_indices = @transform_3, window_bounds = array<i64: 128, 32>}]} {
    %c0_i32 = arith.constant 0 : i32
    %0 = arith.cmpi eq, %arg2, %c0_i32 : i32
    %1 = arith.extui %0 : i1 to i32
    %c0_i32_0 = arith.constant 0 : i32
    %2 = arith.cmpi ne, %1, %c0_i32_0 : i32
    scf.if %2 {
      %cst_10 = arith.constant 0.000000e+00 : f32
      %12 = vector.broadcast %cst_10 : f32 to vector<128x32xf32>
      %c0_11 = arith.constant 0 : index
      %c0_12 = arith.constant 0 : index
      %13 = vector.load %arg7[%c0_11, %c0_12] : memref<128x32xf32, #tpu.memory_space<vmem>>, vector<128x32xf32>
      tpu.vector_store %arg7[%c0_11, %c0_12], %12 {strides = array<i32>} : memref<128x32xf32, #tpu.memory_space<vmem>>, vector<128x32xf32>,
    } else {
    }
    %c0 = arith.constant 0 : index
    %c0_1 = arith.constant 0 : index
    %3 = vector.load %arg7[%c0, %c0_1] : memref<128x32xf32, #tpu.memory_space<vmem>>, vector<128x32xf32>
    %c0_2 = arith.constant 0 : index
    %c0_3 = arith.constant 0 : index
    %4 = vector.load %arg3[%c0_2, %c0_3] : memref<128x48xbf16, #tpu.memory_space<vmem>>, vector<128x48xbf16>
    %c0_4 = arith.constant 0 : index
    %c0_5 = arith.constant 0 : index
    %5 = vector.load %arg4[%c0_4, %c0_5] : memref<48x32xbf16, #tpu.memory_space<vmem>>, vector<48x32xbf16>
    %cst = arith.constant dense<0.000000e+00> : vector<128x32xf32>
    %6 = tpu.matmul %4, %5, %cst {dimension_numbers = #tpu.dot_dimension_numbers<[1], [0], [0], [1], [0, 0, 1, 1], [], []>} : vector<128x48xbf16>, vector<48x32xbf16>, vector<128x32xf32> -> vector<128x32xf32>
    %7 = arith.addf %3, %6 : vector<128x32xf32>
    %c0_6 = arith.constant 0 : index
    %c0_7 = arith.constant 0 : index
    %8 = vector.load %arg7[%c0_6, %c0_7] : memref<128x32xf32, #tpu.memory_space<vmem>>, vector<128x32xf32>
    tpu.vector_store %arg7[%c0_6, %c0_7], %7 {strides = array<i32>} : memref<128x32xf32, #tpu.memory_space<vmem>>, vector<128x32xf32>,
    %c0_i32_8 = arith.constant 0 : i32
    %9 = arith.cmpi eq, %arg2, %c0_i32_8 : i32
    %10 = arith.extui %9 : i1 to i32
    %c0_i32_9 = arith.constant 0 : i32
    %11 = arith.cmpi ne, %10, %c0_i32_9 : i32
    scf.if %11 {
      %c0_10 = arith.constant 0 : index
      %c0_11 = arith.constant 0 : index
      %12 = vector.load %arg7[%c0_10, %c0_11] : memref<128x32xf32, #tpu.memory_space<vmem>>, vector<128x32xf32>
      %c0_12 = arith.constant 0 : index
      %c0_13 = arith.constant 0 : index
      %13 = vector.load %arg5[%c0_12, %c0_13] : memref<1x32xf32, #tpu.memory_space<vmem>>, vector<1x32xf32>
      %14 = vector.broadcast %13 : vector<1x32xf32> to vector<128x32xf32>
      %15 = arith.addf %12, %14 : vector<128x32xf32>
      %c0_14 = arith.constant 0 : index
      %c0_15 = arith.constant 0 : index
      %16 = vector.load %arg6[%c0_14, %c0_15] : memref<128x32xf32, #tpu.memory_space<vmem>>, vector<128x32xf32>
      tpu.vector_store %arg6[%c0_14, %c0_15], %15 {strides = array<i32>} : memref<128x32xf32, #tpu.memory_space<vmem>>, vector<128x32xf32>,
    } else {
    }
    return
  }
  func.func @transform_0(%arg0: i32, %arg1: i32, %arg2: i32) -> (i32, i32) {
    %c0_i32 = arith.constant 0 : i32
    return %arg0, %arg2 : i32, i32
  }
  func.func @transform_1(%arg0: i32, %arg1: i32, %arg2: i32) -> (i32, i32) {
    %c0_i32 = arith.constant 0 : i32
    return %arg2, %arg1 : i32, i32
  }
  func.func @transform_2(%arg0: i32, %arg1: i32, %arg2: i32) -> (i32, i32) {
    %c0_i32 = arith.constant 0 : i32
    %c0_i32_0 = arith.constant 0 : i32
    return %c0_i32, %arg1 : i32, i32
  }
  func.func @transform_3(%arg0: i32, %arg1: i32, %arg2: i32) -> (i32, i32) {
    %c0_i32 = arith.constant 0 : i32
    return %arg0, %arg1 : i32, i32
  }
}

</mosaic_0001>

<llo_original>
// kernel: tpu_custom_call.1
$region0: #{tpu_custom_call.1}
  #allocation0 [shape = 'u32[]', space=smem, size = 0x4, offset = 0x4, fixed_abs, tag = 'smem constant byte address 0x4 - core index']
  #allocation1 [shape = 'u32[144,128]{1,0:T(1,128)}', space=vmem, size = 0x12000, scoped, tag = 'internal scratch']
  #allocation2 [shape = 'f32[128,32]{1,0:T(8,128)}', space=vmem, size = 0x10000, scoped, tag = 'scratch operand']
  %s0 = inlined_call_operand.vmem [shape: bf16[128,48], index: 0, kind: input, shape index: {}]
  %s1 = inlined_call_operand.vmem [shape: bf16[48,32], index: 1, kind: input, shape index: {}]
  %s2 = inlined_call_operand.vmem [shape: f32[1,32], index: 2, kind: input, shape index: {}]
  %s3 = inlined_call_operand.vmem [shape: f32[128,32], index: 3, kind: output, shape index: {}]
  %s4 = sld [smem:[#allocation0]]
  $region30: #{tpu_custom_call.1} parent=0
    _
  %s6 = ssub.s32 1, %s4
  %s7 = scalar_select 0, %s6, %s4
  // Predicated region
  $region2: #{tpu_custom_call.1} parent=0 // pred_check
    _
  $region3: #{tpu_custom_call.1} parent=0 // pred_check_branch
    %9 = sbr.rel (0) target = $region5
  $region4: #{tpu_custom_call.1} parent=0 // pred_region
    _
  $region5: #{tpu_custom_call.1} parent=0 // pred_fallthru
    _
  // Predicated region
  $region6: #{tpu_custom_call.1} parent=0 // pred_check
    _
  $region7: #{tpu_custom_call.1} parent=0 // pred_check_branch
    %11 = sbr.rel (0) target = $region9
  $region8: #{tpu_custom_call.1} parent=0 // pred_region
    _
  $region9: #{tpu_custom_call.1} parent=0 // pred_fallthru
    _
  // Predicated region
  $region10: #{tpu_custom_call.1} parent=0 // pred_check
    _
  $region11: #{tpu_custom_call.1} parent=0 // pred_check_branch
    %13 = sbr.rel (0) target = $region13
  $region12: #{tpu_custom_call.1} parent=0 // pred_region
    _
  $region13: #{tpu_custom_call.1} parent=0 // pred_fallthru
    _
  %p15 = scmp.eq.s32.totalorder 0, 0
  // Predicated region
  $region14: #{tpu_custom_call.1} parent=0 // pred_check
    %p16 = pneg %p15
  $region15: #{tpu_custom_call.1} parent=0 // pred_check_branch
    %18 = sbr.rel (%p16) target = $region17
  $region16: #{tpu_custom_call.1} parent=0 // pred_region
    %vm19 = vcmask 261120
    %20 = vst.msk [vmem:[#allocation2] sm:$0xff] %vm19, 0.0
    %21 = vst.msk [vmem:[#allocation2 + $0x8] sm:$0xff] %vm19, 0.0
    %22 = vst.msk [vmem:[#allocation2 + $0x10] sm:$0xff] %vm19, 0.0
    %23 = vst.msk [vmem:[#allocation2 + $0x18] sm:$0xff] %vm19, 0.0
    %24 = vst.msk [vmem:[#allocation2 + $0x20] sm:$0xff] %vm19, 0.0
    %25 = vst.msk [vmem:[#allocation2 + $0x28] sm:$0xff] %vm19, 0.0
    %26 = vst.msk [vmem:[#allocation2 + $0x30] sm:$0xff] %vm19, 0.0
    %27 = vst.msk [vmem:[#allocation2 + $0x38] sm:$0xff] %vm19, 0.0
    %28 = vst.msk [vmem:[#allocation2 + $0x40] sm:$0xff] %vm19, 0.0
    %29 = vst.msk [vmem:[#allocation2 + $0x48] sm:$0xff] %vm19, 0.0
    %30 = vst.msk [vmem:[#allocation2 + $0x50] sm:$0xff] %vm19, 0.0
    %31 = vst.msk [vmem:[#allocation2 + $0x58] sm:$0xff] %vm19, 0.0
    %32 = vst.msk [vmem:[#allocation2 + $0x60] sm:$0xff] %vm19, 0.0
    %33 = vst.msk [vmem:[#allocation2 + $0x68] sm:$0xff] %vm19, 0.0
    %34 = vst.msk [vmem:[#allocation2 + $0x70] sm:$0xff] %vm19, 0.0
    %35 = vst.msk [vmem:[#allocation2 + $0x78] sm:$0xff] %vm19, 0.0
  $region17: #{tpu_custom_call.1} parent=0 // pred_fallthru
    _
  %v36 = vld [vmem:[#allocation2] sm:$0xff]
  %v37 = vld [vmem:[#allocation2 + $0x8] sm:$0xff]
  %v38 = vld [vmem:[#allocation2 + $0x10] sm:$0xff]
  %v39 = vld [vmem:[#allocation2 + $0x18] sm:$0xff]
  %v40 = vld [vmem:[#allocation2 + $0x20] sm:$0xff]
  %v41 = vld [vmem:[#allocation2 + $0x28] sm:$0xff]
  %v42 = vld [vmem:[#allocation2 + $0x30] sm:$0xff]
  %v43 = vld [vmem:[#allocation2 + $0x38] sm:$0xff]
  %v44 = vld [vmem:[#allocation2 + $0x40] sm:$0xff]
  %v45 = vld [vmem:[#allocation2 + $0x48] sm:$0xff]
  %v46 = vld [vmem:[#allocation2 + $0x50] sm:$0xff]
  %v47 = vld [vmem:[#allocation2 + $0x58] sm:$0xff]
  %v48 = vld [vmem:[#allocation2 + $0x60] sm:$0xff]
  %v49 = vld [vmem:[#allocation2 + $0x68] sm:$0xff]
  %v50 = vld [vmem:[#allocation2 + $0x70] sm:$0xff]
  %v51 = vld [vmem:[#allocation2 + $0x78] sm:$0xff]
  %v52 = vld [vmem:[%s0] sm:$0xf]
  %v53 = vld [vmem:[%s0 + $0x4] sm:$0xf]
  %v54 = vld [vmem:[%s0 + $0x8] sm:$0xf]
  %v55 = vld [vmem:[%s0 + $0xc] sm:$0xf]
  %v56 = vld [vmem:[%s0 + $0x10] sm:$0xf]
  %v57 = vld [vmem:[%s0 + $0x14] sm:$0xf]
  %v58 = vld [vmem:[%s0 + $0x18] sm:$0xf]
  %v59 = vld [vmem:[%s0 + $0x1c] sm:$0xf]
  %v60 = vld [vmem:[%s0 + $0x20] sm:$0xf]
  %v61 = vld [vmem:[%s0 + $0x24] sm:$0xf]
  %v62 = vld [vmem:[%s0 + $0x28] sm:$0xf]
  %v63 = vld [vmem:[%s0 + $0x2c] sm:$0xf]
  %v64 = vld [vmem:[%s0 + $0x30] sm:$0xf]
  %v65 = vld [vmem:[%s0 + $0x34] sm:$0xf]
  %v66 = vld [vmem:[%s0 + $0x38] sm:$0xf]
  %v67 = vld [vmem:[%s0 + $0x3c] sm:$0xf]
  %v68 = vld [vmem:[%s1] sm:$0xf]
  %v69 = vld [vmem:[%s1 + $0x4] sm:$0xf]
  %v70 = vld [vmem:[%s1 + $0x8] sm:$0xf]
  %v71 = vld [vmem:[%s1 + $0xc] sm:$0xf]
  %v72 = vld [vmem:[%s1 + $0x10] sm:$0xf]
  %v73 = vld [vmem:[%s1 + $0x14] sm:$0xf]
  %v90 = vunpack.c.l.b16 %v52
  %v91 = vunpack.c.l.b16 %v53
  %v92 = vunpack.c.l.b16 %v54
  %v93 = vunpack.c.l.b16 %v55
  %v94 = vunpack.c.l.b16 %v56
  %v95 = vunpack.c.l.b16 %v57
  %v96 = vunpack.c.l.b16 %v58
  %v97 = vunpack.c.l.b16 %v59
  %v98 = vunpack.c.l.b16 %v60
  %v99 = vunpack.c.l.b16 %v61
  %v100 = vunpack.c.l.b16 %v62
  %v101 = vunpack.c.l.b16 %v63
  %v102 = vunpack.c.l.b16 %v64
  %v103 = vunpack.c.l.b16 %v65
  %v104 = vunpack.c.l.b16 %v66
  %v105 = vunpack.c.l.b16 %v67
  %v106 = vpack.c.b16 %v91, %v90
  %v107 = vpack.c.b16 %v93, %v92
  %v108 = vpack.c.b16 %v95, %v94
  %v109 = vpack.c.b16 %v97, %v96
  %v110 = vpack.c.b16 %v99, %v98
  %v111 = vpack.c.b16 %v101, %v100
  %v112 = vpack.c.b16 %v103, %v102
  %v113 = vpack.c.b16 %v105, %v104
  %v120 = vunpack.c.l.b16 %v68
  %v121 = vunpack.c.l.b16 %v69
  %v122 = vunpack.c.l.b16 %v70
  %v123 = vunpack.c.l.b16 %v71
  %v124 = vunpack.c.l.b16 %v72
  %v125 = vunpack.c.l.b16 %v73
  %v126 = vpack.c.b16 %v121, %v120
  %v127 = vpack.c.b16 %v123, %v122
  %v128 = vpack.c.b16 %v125, %v124
  %vm132 = vcmask 392192
  %v134 = vsel %vm132, %v106, 0
  %v137 = vsel %vm132, %v107, 0
  %v140 = vsel %vm132, %v108, 0
  %v143 = vsel %vm132, %v109, 0
  %v146 = vsel %vm132, %v110, 0
  %v149 = vsel %vm132, %v111, 0
  %v152 = vsel %vm132, %v112, 0
  %v155 = vsel %vm132, %v113, 0
  %157 = vmatprep.subr.bf16.mxu0 0
  %158 = vmatpush1.bf16.msra.mxu0 0
  %159 = vmatprep.subr.bf16.mxu0 0
  %160 = vmatpush1.bf16.msra.mxu0 0
  %161 = vmatprep.subr.bf16.mxu0 0
  %162 = vmatpush1.bf16.msra.mxu0 0
  %163 = vmatprep.subr.bf16.mxu0 0
  %164 = vmatpush1.bf16.msra.mxu0 0
  %165 = vmatprep.subr.bf16.mxu0 0
  %166 = vmatpush1.bf16.msra.mxu0 0
  %167 = vmatprep.subr.bf16.mxu0 0
  %168 = vmatpush1.bf16.msra.mxu0 %v128
  %169 = vmatprep.subr.bf16.mxu0 0
  %170 = vmatpush1.bf16.msra.mxu0 %v127
  %171 = vmatprep.subr.bf16.mxu0 0
  %172 = vmatpush1.bf16.msra.mxu0 %v126
  %173 = vmatprep.subr.bf16.mxu0 0
  %174 = vmatpush2.bf16.msra.mxu0 0
  %175 = vmatprep.subr.bf16.mxu0 0
  %176 = vmatpush2.bf16.msra.mxu0 0
  %177 = vmatprep.subr.bf16.mxu0 0
  %178 = vmatpush2.bf16.msra.mxu0 0
  %179 = vmatprep.subr.bf16.mxu0 0
  %180 = vmatpush2.bf16.msra.mxu0 0
  %181 = vmatprep.subr.bf16.mxu0 0
  %182 = vmatpush2.bf16.msra.mxu0 0
  %183 = vmatprep.subr.bf16.mxu0 0
  %184 = vmatpush2.bf16.msra.mxu0 0
  %185 = vmatprep.subr.bf16.mxu0 0
  %186 = vmatpush2.bf16.msra.mxu0 0
  %187 = vmatprep.subr.bf16.mxu0 0
  %188 = vmatpush2.bf16.msra.mxu0 0
  %189 = vmatprep.mubr.bf16.mxu0 0
  %190 = vmatmul.mubr.bf16.gmra.mxu0 %v134
  %v191 = vpop.f32.mrf.mxu0
  %v192 = vadd.f32 0.0, %v191
  %v193 = vpop.f32.mrf.mxu0
  %v194 = vpop.f32.mrf.mxu0
  %v195 = vadd.f32 0.0, %v194
  %v196 = vpop.f32.mrf.mxu0
  %197 = vmatprep.mubr.bf16.mxu0 0
  %198 = vmatmul.mubr.bf16.gmra.mxu0 %v137
  %v199 = vpop.f32.mrf.mxu0
  %v200 = vadd.f32 0.0, %v199
  %v201 = vpop.f32.mrf.mxu0
  %v202 = vpop.f32.mrf.mxu0
  %v203 = vadd.f32 0.0, %v202
  %v204 = vpop.f32.mrf.mxu0
  %205 = vmatprep.mubr.bf16.mxu0 0
  %206 = vmatmul.mubr.bf16.gmra.mxu0 %v140
  %v207 = vpop.f32.mrf.mxu0
  %v208 = vadd.f32 0.0, %v207
  %v209 = vpop.f32.mrf.mxu0
  %v210 = vpop.f32.mrf.mxu0
  %v211 = vadd.f32 0.0, %v210
  %v212 = vpop.f32.mrf.mxu0
  %213 = vmatprep.mubr.bf16.mxu0 0
  %214 = vmatmul.mubr.bf16.gmra.mxu0 %v143
  %v215 = vpop.f32.mrf.mxu0
  %v216 = vadd.f32 0.0, %v215
  %v217 = vpop.f32.mrf.mxu0
  %v218 = vpop.f32.mrf.mxu0
  %v219 = vadd.f32 0.0, %v218
  %v220 = vpop.f32.mrf.mxu0
  %221 = vmatprep.mubr.bf16.mxu0 0
  %222 = vmatmul.mubr.bf16.gmra.mxu0 %v146
  %v223 = vpop.f32.mrf.mxu0
  %v224 = vadd.f32 0.0, %v223
  %v225 = vpop.f32.mrf.mxu0
  %v226 = vpop.f32.mrf.mxu0
  %v227 = vadd.f32 0.0, %v226
  %v228 = vpop.f32.mrf.mxu0
  %229 = vmatprep.mubr.bf16.mxu0 0
  %230 = vmatmul.mubr.bf16.gmra.mxu0 %v149
  %v231 = vpop.f32.mrf.mxu0
  %v232 = vadd.f32 0.0, %v231
  %v233 = vpop.f32.mrf.mxu0
  %v234 = vpop.f32.mrf.mxu0
  %v235 = vadd.f32 0.0, %v234
  %v236 = vpop.f32.mrf.mxu0
  %237 = vmatprep.mubr.bf16.mxu0 0
  %238 = vmatmul.mubr.bf16.gmra.mxu0 %v152
  %v239 = vpop.f32.mrf.mxu0
  %v240 = vadd.f32 0.0, %v239
  %v241 = vpop.f32.mrf.mxu0
  %v242 = vpop.f32.mrf.mxu0
  %v243 = vadd.f32 0.0, %v242
  %v244 = vpop.f32.mrf.mxu0
  %245 = vmatprep.mubr.bf16.mxu0 0
  %246 = vmatmul.mubr.bf16.gmra.mxu0 %v155
  %v247 = vpop.f32.mrf.mxu0
  %v248 = vadd.f32 0.0, %v247
  %v249 = vpop.f32.mrf.mxu0
  %v250 = vpop.f32.mrf.mxu0
  %v251 = vadd.f32 0.0, %v250
  %v252 = vpop.f32.mrf.mxu0
  %253 = vdwg.mxu0
  %v254 = vadd.f32 %v36, %v192
  %v255 = vadd.f32 %v37, %v195
  %v256 = vadd.f32 %v38, %v200
  %v257 = vadd.f32 %v39, %v203
  %v258 = vadd.f32 %v40, %v208
  %v259 = vadd.f32 %v41, %v211
  %v260 = vadd.f32 %v42, %v216
  %v261 = vadd.f32 %v43, %v219
  %v262 = vadd.f32 %v44, %v224
  %v263 = vadd.f32 %v45, %v227
  %v264 = vadd.f32 %v46, %v232
  %v265 = vadd.f32 %v47, %v235
  %v266 = vadd.f32 %v48, %v240
  %v267 = vadd.f32 %v49, %v243
  %v268 = vadd.f32 %v50, %v248
  %v269 = vadd.f32 %v51, %v251
  %vm270 = vcmask 261120
  %271 = vst.msk [vmem:[#allocation2] sm:$0xff] %vm270, %v254
  %272 = vst.msk [vmem:[#allocation2 + $0x8] sm:$0xff] %vm270, %v255
  %273 = vst.msk [vmem:[#allocation2 + $0x10] sm:$0xff] %vm270, %v256
  %274 = vst.msk [vmem:[#allocation2 + $0x18] sm:$0xff] %vm270, %v257
  %275 = vst.msk [vmem:[#allocation2 + $0x20] sm:$0xff] %vm270, %v258
  %276 = vst.msk [vmem:[#allocation2 + $0x28] sm:$0xff] %vm270, %v259
  %277 = vst.msk [vmem:[#allocation2 + $0x30] sm:$0xff] %vm270, %v260
  %278 = vst.msk [vmem:[#allocation2 + $0x38] sm:$0xff] %vm270, %v261
  %279 = vst.msk [vmem:[#allocation2 + $0x40] sm:$0xff] %vm270, %v262
  %280 = vst.msk [vmem:[#allocation2 + $0x48] sm:$0xff] %vm270, %v263
  %281 = vst.msk [vmem:[#allocation2 + $0x50] sm:$0xff] %vm270, %v264
  %282 = vst.msk [vmem:[#allocation2 + $0x58] sm:$0xff] %vm270, %v265
  %283 = vst.msk [vmem:[#allocation2 + $0x60] sm:$0xff] %vm270, %v266
  %284 = vst.msk [vmem:[#allocation2 + $0x68] sm:$0xff] %vm270, %v267
  %285 = vst.msk [vmem:[#allocation2 + $0x70] sm:$0xff] %vm270, %v268
  %286 = vst.msk [vmem:[#allocation2 + $0x78] sm:$0xff] %vm270, %v269
  // Predicated region
  $region18: #{tpu_custom_call.1} parent=0 // pred_check
    %p287 = pneg %p15
  $region19: #{tpu_custom_call.1} parent=0 // pred_check_branch
    %289 = sbr.rel (%p287) target = $region21
  $region20: #{tpu_custom_call.1} parent=0 // pred_region
    %v290 = vld [vmem:[#allocation2] sm:$0xff]
    %v291 = vld [vmem:[#allocation2 + $0x8] sm:$0xff]
    %v292 = vld [vmem:[#allocation2 + $0x10] sm:$0xff]
    %v293 = vld [vmem:[#allocation2 + $0x18] sm:$0xff]
    %v294 = vld [vmem:[#allocation2 + $0x20] sm:$0xff]
    %v295 = vld [vmem:[#allocation2 + $0x28] sm:$0xff]
    %v296 = vld [vmem:[#allocation2 + $0x30] sm:$0xff]
    %v297 = vld [vmem:[#allocation2 + $0x38] sm:$0xff]
    %v298 = vld [vmem:[#allocation2 + $0x40] sm:$0xff]
    %v299 = vld [vmem:[#allocation2 + $0x48] sm:$0xff]
    %v300 = vld [vmem:[#allocation2 + $0x50] sm:$0xff]
    %v301 = vld [vmem:[#allocation2 + $0x58] sm:$0xff]
    %v302 = vld [vmem:[#allocation2 + $0x60] sm:$0xff]
    %v303 = vld [vmem:[#allocation2 + $0x68] sm:$0xff]
    %v304 = vld [vmem:[#allocation2 + $0x70] sm:$0xff]
    %v305 = vld [vmem:[#allocation2 + $0x78] sm:$0xff]
    %v306 = vld [vmem:[%s2] sm:$0x1]
    %v308 = vlaneseq
    %v309 = vshrl.u32 %v308, 7
    %v310 = vsub.s32 0, %v309
    %v311 = vrot.slane %v306, %v310
    %v313 = vadd.f32 %v290, %v311
    %v314 = vadd.f32 %v291, %v311
    %v315 = vadd.f32 %v292, %v311
    %v316 = vadd.f32 %v293, %v311
    %v317 = vadd.f32 %v294, %v311
    %v318 = vadd.f32 %v295, %v311
    %v319 = vadd.f32 %v296, %v311
    %v320 = vadd.f32 %v297, %v311
    %v321 = vadd.f32 %v298, %v311
    %v322 = vadd.f32 %v299, %v311
    %v323 = vadd.f32 %v300, %v311
    %v324 = vadd.f32 %v301, %v311
    %v325 = vadd.f32 %v302, %v311
    %v326 = vadd.f32 %v303, %v311
    %v327 = vadd.f32 %v304, %v311
    %v328 = vadd.f32 %v305, %v311
    %329 = vst.msk [vmem:[%s3] sm:$0xff] %vm270, %v313
    %330 = vst.msk [vmem:[%s3 + $0x8] sm:$0xff] %vm270, %v314
    %331 = vst.msk [vmem:[%s3 + $0x10] sm:$0xff] %vm270, %v315
    %332 = vst.msk [vmem:[%s3 + $0x18] sm:$0xff] %vm270, %v316
    %333 = vst.msk [vmem:[%s3 + $0x20] sm:$0xff] %vm270, %v317
    %334 = vst.msk [vmem:[%s3 + $0x28] sm:$0xff] %vm270, %v318
    %335 = vst.msk [vmem:[%s3 + $0x30] sm:$0xff] %vm270, %v319
    %336 = vst.msk [vmem:[%s3 + $0x38] sm:$0xff] %vm270, %v320
    %337 = vst.msk [vmem:[%s3 + $0x40] sm:$0xff] %vm270, %v321
    %338 = vst.msk [vmem:[%s3 + $0x48] sm:$0xff] %vm270, %v322
    %339 = vst.msk [vmem:[%s3 + $0x50] sm:$0xff] %vm270, %v323
    %340 = vst.msk [vmem:[%s3 + $0x58] sm:$0xff] %vm270, %v324
    %341 = vst.msk [vmem:[%s3 + $0x60] sm:$0xff] %vm270, %v325
    %342 = vst.msk [vmem:[%s3 + $0x68] sm:$0xff] %vm270, %v326
    %343 = vst.msk [vmem:[%s3 + $0x70] sm:$0xff] %vm270, %v327
    %344 = vst.msk [vmem:[%s3 + $0x78] sm:$0xff] %vm270, %v328
  $region21: #{tpu_custom_call.1} parent=0 // pred_fallthru
    _
  // Predicated region
  $region22: #{tpu_custom_call.1} parent=0 // pred_check
    _
  $region23: #{tpu_custom_call.1} parent=0 // pred_check_branch
    %346 = sbr.rel (0) target = $region25
  $region24: #{tpu_custom_call.1} parent=0 // pred_region
    _
  $region25: #{tpu_custom_call.1} parent=0 // pred_fallthru
    _
  // Predicated region
  $region26: #{tpu_custom_call.1} parent=0 // pred_check
    _
  $region27: #{tpu_custom_call.1} parent=0 // pred_check_branch
    %348 = sbr.rel (0) target = $region29
  $region28: #{tpu_custom_call.1} parent=0 // pred_region
    _
  $region29: #{tpu_custom_call.1} parent=0 // pred_fallthru
    _

</llo_original>
